<compile_context>
chip_gen: v7x
topology: tpu7x:2x2x1
jax: 0.10.0
libtpu: 0.0.40
codegen_flags: <defaults>
</compile_context>

<pallas_src>
import functools

import numpy as np
import jax
import jax.numpy as jnp
from jax.experimental import pallas as pl
from jax.experimental.pallas import tpu as pltpu

T_STEPS = 20
NUM_MODS = 6
HIDDEN = 32
FEAT = 3
ENC_K = 64                                   # T*FEAT = 60 padded to 64 (dense loads)

# fused head column layout: [ reg(240) | rec(40) | id(2) | emb(32) | pad ] = 384
HEAD_REG = slice(0, NUM_MODS * T_STEPS * 2)                    # 0:240
HEAD_REC = slice(HEAD_REG.stop, HEAD_REG.stop + T_STEPS * 2)   # 240:280
HEAD_ID = slice(HEAD_REC.stop, HEAD_REC.stop + 2)              # 280:282
HEAD_EMB = slice(HEAD_ID.stop, HEAD_ID.stop + HIDDEN)          # 282:314
HEADS_N = 384

# fused output slab layout: [ reg(240) | rec(40) | ids_hist(2) | ids_fut(2) | 0 ]
OUT_REG = slice(0, 240)
OUT_REC = slice(240, 280)
OUT_IDH = slice(280, 282)
OUT_IDF = slice(282, 284)
OUT_W = 384


def _round_up(x, m):
    return ((x + m - 1) // m) * m


# ------------------------------ fused pipeline ------------------------------

def _pipeline_kernel(feats_ref, enc_w_ref, enc_b_ref, heads_w_ref, heads_b_ref,
                     sel_emb_ref, sel_enc_ref, out_ref):
    # NOTE: bias is added to the zero-padded rows as well; those rows are never
    # selected by sel_* and the wrapper slices them off — do not reduce over
    # the padded output.
    hw = heads_w_ref[...]                     # (32, 384) bf16 — loaded once
    hb = heads_b_ref[...]                     # (1, 384)  f32

    def heads(a):                             # shared fused head matmul (MXU, bf16)
        return jnp.dot(a.astype(jnp.bfloat16), hw,
                       preferred_element_type=jnp.float32) + hb

    # state_encoder stand-in on every (hist + ego-fut) row in ONE matmul
    x = feats_ref[...].astype(jnp.bfloat16)
    h = jnp.maximum(
        jnp.dot(x, enc_w_ref[...], preferred_element_type=jnp.float32)
        + enc_b_ref[...], 0.0)                                     # (Npad, 32)

    # interaction_embedder stand-in (hist rows are the ones consumed)
    heads0 = heads(h)
    emb_all = h + jnp.maximum(heads0[:, HEAD_EMB], 0.0)

    # data_mod row duplication / gather as one-hot selection matmuls (kept in
    # f32 so the residual path is an exact gather): row 0 of each group is the
    # raw ego-fut encoding, tail rows are embedded hist actors.
    actors_mod = (
        jnp.dot(sel_emb_ref[...], emb_all, preferred_element_type=jnp.float32)
        + jnp.dot(sel_enc_ref[...], h, preferred_element_type=jnp.float32))

    heads1 = heads(actors_mod)                # identifier (ids_hist) + embedder
    actors2 = actors_mod + jnp.maximum(heads1[:, HEAD_EMB], 0.0)

    heads2 = heads(actors2)                   # decoder (reg/rec) + embedder
    representation = actors2 + jnp.maximum(heads2[:, HEAD_EMB], 0.0)

    heads3 = heads(representation)            # identifier (ids_fut); the full 384
                                              # cols are free since the weight slab
                                              # is already VMEM-resident.

    out_ref[:, 0:HEAD_REC.stop] = heads2[:, 0:HEAD_REC.stop]       # reg | rec
    out_ref[:, OUT_IDH] = heads1[:, HEAD_ID]
    out_ref[:, OUT_IDF] = heads3[:, HEAD_ID]
    out_ref[:, OUT_IDF.stop:] = jnp.zeros(
        (out_ref.shape[0], OUT_W - OUT_IDF.stop), jnp.float32)


def fused_pipeline(feats_pad, sel_emb, sel_enc, params):
    # TODO(synk): no M-row grid / megacore split — at M <= ~48 rows a row-tile
    # grid (for v7x's 2 TCs) is pure overhead; revisit if M grows to hundreds.
    m_pad = sel_emb.shape[0]
    return pl.pallas_call(
        _pipeline_kernel,
        out_shape=jax.ShapeDtypeStruct((m_pad, OUT_W), jnp.float32),
        in_specs=[pl.BlockSpec(memory_space=pltpu.MemorySpace.VMEM)] * 7,
        out_specs=pl.BlockSpec(memory_space=pltpu.MemorySpace.VMEM),
    )(feats_pad, params['enc_w'], params['enc_b'],
      params['heads_w'], params['heads_b'], sel_emb, sel_enc)


# ------------------------------- SE(2) kernel --------------------------------

def _se2_kernel(x_ref, y_ref, par_ref, xo_ref, yo_ref, *, inverse):
    # x/y: (S_pad, PPAD) f32; par: (S_pad, 8) = [r00 r01 r10 r11 ox oy 0 0]
    x = x_ref[...]
    y = y_ref[...]
    r00 = par_ref[:, 0:1]
    r01 = par_ref[:, 1:2]
    r10 = par_ref[:, 2:3]
    r11 = par_ref[:, 3:4]
    ox = par_ref[:, 4:5]
    oy = par_ref[:, 5:6]
    if inverse:
        # world -> ego: out = R @ (p - orig)
        dx = x - ox
        dy = y - oy
        xo_ref[...] = r00 * dx + r01 * dy
        yo_ref[...] = r10 * dx + r11 * dy
    else:
        # ego -> world: out = p @ R + orig
        xo_ref[...] = x * r00 + y * r10 + ox
        yo_ref[...] = x * r01 + y * r11 + oy


def se2_transform_slab(slab, par_rows, inverse=False):
    """slab: (S, P, 2) points; par_rows: (S, 6) = [rot row-major | orig].

    One ungridded, sublane/lane-dense elementwise kernel over the whole slab.
    Returns the transformed (S, P, 2) slab (pad rows/cols produce garbage that
    is sliced off here).
    """
    s, p = int(slab.shape[0]), int(slab.shape[1])
    s_pad = max(8, _round_up(s, 8))
    ppad = max(128, _round_up(p, 128))
    slab = jnp.pad(slab.astype(jnp.float32),
                   ((0, s_pad - s), (0, ppad - p), (0, 0)))
    par = jnp.pad(jnp.asarray(par_rows, jnp.float32),
                  ((0, s_pad - s), (0, 8 - int(par_rows.shape[1]))))
    xo, yo = pl.pallas_call(
        functools.partial(_se2_kernel, inverse=inverse),
        out_shape=(jax.ShapeDtypeStruct((s_pad, ppad), jnp.float32),
                   jax.ShapeDtypeStruct((s_pad, ppad), jnp.float32)),
        in_specs=[pl.BlockSpec(memory_space=pltpu.MemorySpace.VMEM)] * 3,
        out_specs=(pl.BlockSpec(memory_space=pltpu.MemorySpace.VMEM),
                   pl.BlockSpec(memory_space=pltpu.MemorySpace.VMEM)),
    )(slab[..., 0], slab[..., 1], par)
    return jnp.stack([xo[:s, :p], yo[:s, :p]], axis=-1)


# ------------------------- parameter initialization --------------------------

def init_params(key):
    ks = jax.random.split(key, 5)
    s = 0.1
    enc_w = s * jax.random.normal(ks[0], (T_STEPS * FEAT, HIDDEN), jnp.float32)
    emb_w = s * jax.random.normal(ks[1], (HIDDEN, HIDDEN), jnp.float32)
    id_w = s * jax.random.normal(ks[2], (HIDDEN, 2), jnp.float32)
    reg_w = s * jax.random.normal(ks[3], (HIDDEN, NUM_MODS * T_STEPS * 2),
                                  jnp.float32)
    rec_w = s * jax.random.normal(ks[4], (HIDDEN, T_STEPS * 2), jnp.float32)

    # encoder contraction dim padded 60 -> 64; fused head slab padded to 384
    enc_w_pad = jnp.zeros((ENC_K, HIDDEN), jnp.float32
                          ).at[:T_STEPS * FEAT, :].set(enc_w)
    heads = jnp.concatenate([reg_w, rec_w, id_w, emb_w], axis=1)        # (32, 314)
    heads_w_pad = jnp.zeros((HIDDEN, HEADS_N), jnp.float32
                            ).at[:, :heads.shape[1]].set(heads)

    return dict(
        enc_w=enc_w_pad.astype(jnp.bfloat16),       # bf16 MXU operand
        enc_b=jnp.zeros((1, HIDDEN), jnp.float32),
        heads_w=heads_w_pad.astype(jnp.bfloat16),   # bf16 MXU operand
        heads_b=jnp.zeros((1, HEADS_N), jnp.float32),
    )


# --------------------------------- Net.forward --------------------------------

def net_forward(data, params):
    B = len(data['city'])

    # ---- reference semantics: empty ego_aug lists become (0, 20, 2) ----------
    for i in range(B):
        if isinstance(data['ego_aug'][i]['traj'], list):
            data['ego_aug'][i]['traj'] = jnp.zeros((0, T_STEPS, 2), jnp.float32)

    # ---- single device->host sync for ALL data-dependent NaN masks -----------
    mask_parts = []
    for i in range(B):
        traj = data['ego_aug'][i]['traj']
        mask_parts.append(jnp.any(jnp.isnan(traj), axis=(1, 2)))            # (K_i,)
        mask_parts.append(jnp.isnan(jnp.concatenate(
            [data['gt_preds'][i][0:1, 0, 0], traj[:, 0, 0]], 0)))           # (K_i+1,)
    mask_flat = np.asarray(jnp.concatenate(mask_parts))
    ego_nan, recon_nan, off = [], [], 0
    for i in range(B):
        k = int(data['ego_aug'][i]['traj'].shape[0])
        ego_nan.append(mask_flat[off:off + k]); off += k
        recon_nan.append(mask_flat[off:off + k + 1]); off += k + 1

    # ---- host-side index bookkeeping ------------------------------------------
    na = [int(data['hist_feats'][i].shape[1]) for i in range(B)]
    valid_idx = [np.where(~ego_nan[i])[0] for i in range(B)]
    n_valid = [len(v) for v in valid_idx]
    e_cnt = [1 + n_valid[i] for i in range(B)]             # ego-fut rows per batch
    nh = int(np.sum(na))
    sp1 = int(np.sum(n_valid))
    hist_off = np.concatenate([[0], np.cumsum(na)])[:-1].astype(np.int64)
    p1_off = np.concatenate([[0], np.cumsum(n_valid)])[:-1].astype(np.int64)
    ego_off = np.concatenate([[0], np.cumsum(e_cnt)])[:-1].astype(np.int64)

    # ---- per-batch SE(2) parameter table: [rot row-major | orig] -------------
    par_table = jnp.concatenate(
        [jnp.concatenate([data['rots'][i][0].reshape(1, 4),
                          data['origs'][i][0].reshape(1, 2)], axis=1)
         for i in range(B)], axis=0)                                     # (B, 6)

    # ---- ego_fut_data_form: ONE world->ego SE(2) call over all valid trajs ---
    if sp1 > 0:
        p1_slab = jnp.concatenate(
            [data['ego_aug'][i]['traj'][valid_idx[i]]
             for i in range(B) if n_valid[i] > 0], axis=0)              # (sp1,20,2)
        p1_xy = se2_transform_slab(
            p1_slab, par_table[np.repeat(np.arange(B), n_valid)], inverse=True)
        ego_xy_rows = jnp.concatenate(
            [p1_xy, jnp.ones((sp1, T_STEPS, 1), jnp.float32)],
            axis=2).reshape(sp1, T_STEPS * FEAT)
    else:
        ego_xy_rows = jnp.zeros((0, T_STEPS * FEAT), jnp.float32)

    # ---- encoder input rows: [hist rows | per-batch fut row | valid ego rows] -
    # TODO(synk): graph / ctrs are only consumed by the injected submodules,
    # which the deterministic stand-ins ignore.
    hist_rows = jnp.concatenate(
        [data['hist_feats'][i][0].reshape(na[i], T_STEPS * FEAT)
         for i in range(B)], 0)
    fut_rows = jnp.concatenate(
        [data['fut_feats'][i][0, 0].reshape(1, T_STEPS * FEAT)
         for i in range(B)], 0)
    feats_all = jnp.concatenate([hist_rows, fut_rows, ego_xy_rows], 0)
    n_enc = nh + B + sp1
    n_enc_pad = max(8, _round_up(n_enc, 8))
    feats_pad = jnp.pad(feats_all,
                        ((0, n_enc_pad - n_enc), (0, ENC_K - T_STEPS * FEAT)))

    # ---- data_mod bookkeeping + one-hot selection matrices (host numpy) -------
    actor_idcs_mod, actor_ctrs_mod = [], []
    group_batch, row_batch = [], []
    se_r, se_c, sn_r, sn_c = [], [], [], []
    count = 0
    for i in range(B):
        for j in range(e_cnt[i]):
            rows = np.arange(count, count + na[i])
            actor_idcs_mod.append(rows)
            actor_ctrs_mod.append(data['ctrs'][i][0])
            group_batch.append(i)
            row_batch.extend([i] * na[i])
            # row 0 of the group: raw (un-embedded) ego-fut encoding
            src = nh + i if j == 0 else nh + B + int(p1_off[i]) + (j - 1)
            sn_r.append(count); sn_c.append(src)
            # rows 1..na-1: embedded hist actors of batch i
            for r in range(1, na[i]):
                se_r.append(count + r); se_c.append(int(hist_off[i]) + r)
            count += na[i]
    m_mod = count
    g_num = len(actor_idcs_mod)
    m_pad = max(8, _round_up(m_mod, 8))
    sel_emb = np.zeros((m_pad, n_enc_pad), np.float32)
    sel_enc = np.zeros((m_pad, n_enc_pad), np.float32)
    if se_r:
        sel_emb[se_r, se_c] = 1.0
    sel_enc[sn_r, sn_c] = 1.0
    tails = [x[1:] for x in actor_idcs_mod if len(x) > 1]
    sel_tail = (np.concatenate(tails).astype(np.int64)
                if tails else np.zeros((0,), np.int64))

    # ---- ONE fused pallas_call: encoder + embedder + identifier + decoder -----
    out_slab = fused_pipeline(feats_pad, jnp.asarray(sel_emb),
                              jnp.asarray(sel_enc), params)[:m_mod]

    # ---- unpack heads (batched gathers, no per-row loops) ---------------------
    first_rows = np.asarray([x[0] for x in actor_idcs_mod], np.int64)
    reg_rows = out_slab[:, OUT_REG].reshape(m_mod, NUM_MODS * T_STEPS, 2)
    rec_rows = out_slab[first_rows][:, OUT_REC].reshape(g_num, T_STEPS, 2)
    id_cols = out_slab[sel_tail][:, OUT_IDH.start:OUT_IDF.stop]
    ids_hist = id_cols[:, 0:2]
    ids_fut = id_cols[:, 2:4]

    # ---- ego->world transform of decoder outputs: ONE SE(2) call --------------
    # 20-point reconstruction rows and 120-point per-mod-row reg rows both fit
    # the minimum 128-lane budget, so they share one call without over-padding.
    p2_pts = 128
    p2_slab = jnp.concatenate(
        [jnp.pad(rec_rows, ((0, 0), (0, p2_pts - T_STEPS), (0, 0))),
         jnp.pad(reg_rows, ((0, 0), (0, p2_pts - NUM_MODS * T_STEPS), (0, 0)))],
        axis=0)
    p2_par = par_table[np.asarray(group_batch + row_batch, np.int64)]
    p2_out = se2_transform_slab(p2_slab, p2_par, inverse=False)
    recon_w = p2_out[:g_num, :T_STEPS]
    reg_w = p2_out[g_num:, :NUM_MODS * T_STEPS].reshape(
        m_mod, NUM_MODS, T_STEPS, 2)
    out = {'reg': [], 'reconstruction': []}
    for g, idcs in enumerate(actor_idcs_mod):
        out['reconstruction'].append(recon_w[g])
        out['reg'].append(reg_w[int(idcs[0]):int(idcs[-1]) + 1])

    # ---- reconstruction ground truth (host mask already computed) -------------
    recon_cat = jnp.concatenate(
        [jnp.concatenate([data['gt_preds'][i][0:1],
                          data['ego_aug'][i]['traj']], 0) for i in range(B)], 0)
    roff = np.concatenate(
        [[0], np.cumsum([1 + int(data['ego_aug'][i]['traj'].shape[0])
                         for i in range(B)])])[:-1].astype(np.int64)
    keep = np.concatenate(
        [roff[i] + np.where(~recon_nan[i])[0] for i in range(B)]).astype(np.int64)
    reconstruction_gt = recon_cat[keep]

    # TODO(synk): the reference also builds fut_data (get_fut_data) and runs
    # state_encoder on it, but discards the result; that dead chain (one SE(2)
    # pass + one encoder pass) is dropped here — outputs are unaffected.

    pred_gt = jnp.concatenate([data['gt_preds'][i][1:] for i in range(B)], 0)

    ego_fut_actor_idcs = [jnp.arange(int(ego_off[i]), int(ego_off[i]) + e_cnt[i])
                          for i in range(B)]
    return (out, [ids_hist, ids_fut], [reconstruction_gt, pred_gt],
            [ego_fut_actor_idcs,
             [jnp.asarray(x) for x in actor_idcs_mod],
             actor_ctrs_mod])


# -------------------------------------- main ----------------------------------

if __name__ == "__main__":
    key = jax.random.PRNGKey(0)
    keys = iter(jax.random.split(key, 32))

    batch_num = 2
    num_actors = [3, 2]
    ego_aug_k = [2, 1]
    thetas = [0.3, -0.7]

    data = {'city': ['CITY_A', 'CITY_B'], 'hist_feats': [], 'ctrs': [],
            'fut_feats': [], 'ego_aug': [], 'rots': [], 'origs': [],
            'gt_preds': [], 'graph': []}

    for i in range(batch_num):
        na_i = num_actors[i]
        data['hist_feats'].append(
            jax.random.normal(next(keys), (1, na_i, T_STEPS, FEAT), jnp.float32))
        data['ctrs'].append(
            jax.random.normal(next(keys), (1, na_i, 2), jnp.float32))
        data['fut_feats'].append(
            jax.random.normal(next(keys), (1, 1, T_STEPS, FEAT), jnp.float32))
        traj = 5.0 * jax.random.normal(next(keys), (ego_aug_k[i], T_STEPS, 2),
                                       jnp.float32)
        if i == 0:
            traj = traj.at[1].set(jnp.nan)   # exercise the NaN-skip path
        data['ego_aug'].append({'traj': traj})
        c, s = float(np.cos(thetas[i])), float(np.sin(thetas[i]))
        data['rots'].append(jnp.asarray([[[c, -s], [s, c]]], jnp.float32))
        data['origs'].append(jnp.asarray([[1.0 + i, -2.0 * i]], jnp.float32))
        data['gt_preds'].append(
            10.0 * jax.random.normal(next(keys), (na_i, T_STEPS, 2), jnp.float32))
        data['graph'].append({'num_nodes': 0})

    params = init_params(jax.random.PRNGKey(42))

    result = net_forward(data, params)
    for leaf in jax.tree_util.tree_leaves(result):
        if hasattr(leaf, "block_until_ready"):
            leaf.block_until_ready()
    print("KERNEL_OK")
</pallas_src>

<mosaic_0001>
module attributes {stable_mosaic.version = 11 : i64} {
  func.func @_se2_kernel(%arg0: memref<8x128xf32, #tpu.memory_space<vmem>>, %arg1: memref<8x128xf32, #tpu.memory_space<vmem>>, %arg2: memref<8x8xf32, #tpu.memory_space<vmem>>, %arg3: memref<8x128xf32, #tpu.memory_space<vmem>>, %arg4: memref<8x128xf32, #tpu.memory_space<vmem>>) attributes {dimension_semantics = [], scalar_prefetch = 0 : i64, scratch_operands = 0 : i64, tpu.core_type = #tpu.core_type<tc>} {
    %c0 = arith.constant 0 : index
    %c0_0 = arith.constant 0 : index
    %0 = vector.load %arg0[%c0, %c0_0] : memref<8x128xf32, #tpu.memory_space<vmem>>, vector<8x128xf32>
    %c0_1 = arith.constant 0 : index
    %c0_2 = arith.constant 0 : index
    %1 = vector.load %arg1[%c0_1, %c0_2] : memref<8x128xf32, #tpu.memory_space<vmem>>, vector<8x128xf32>
    %c0_3 = arith.constant 0 : index
    %c0_4 = arith.constant 0 : index
    %2 = vector.load %arg2[%c0_3, %c0_4] : memref<8x8xf32, #tpu.memory_space<vmem>>, vector<8x1xf32>
    %c0_5 = arith.constant 0 : index
    %c1 = arith.constant 1 : index
    %3 = vector.load %arg2[%c0_5, %c1] : memref<8x8xf32, #tpu.memory_space<vmem>>, vector<8x1xf32>
    %c0_6 = arith.constant 0 : index
    %c2 = arith.constant 2 : index
    %4 = vector.load %arg2[%c0_6, %c2] : memref<8x8xf32, #tpu.memory_space<vmem>>, vector<8x1xf32>
    %c0_7 = arith.constant 0 : index
    %c3 = arith.constant 3 : index
    %5 = vector.load %arg2[%c0_7, %c3] : memref<8x8xf32, #tpu.memory_space<vmem>>, vector<8x1xf32>
    %c0_8 = arith.constant 0 : index
    %c4 = arith.constant 4 : index
    %6 = vector.load %arg2[%c0_8, %c4] : memref<8x8xf32, #tpu.memory_space<vmem>>, vector<8x1xf32>
    %c0_9 = arith.constant 0 : index
    %c5 = arith.constant 5 : index
    %7 = vector.load %arg2[%c0_9, %c5] : memref<8x8xf32, #tpu.memory_space<vmem>>, vector<8x1xf32>
    %8 = vector.broadcast %6 : vector<8x1xf32> to vector<8x128xf32>
    %9 = arith.subf %0, %8 : vector<8x128xf32>
    %10 = vector.broadcast %7 : vector<8x1xf32> to vector<8x128xf32>
    %11 = arith.subf %1, %10 : vector<8x128xf32>
    %12 = vector.broadcast %2 : vector<8x1xf32> to vector<8x128xf32>
    %13 = arith.mulf %12, %9 : vector<8x128xf32>
    %14 = vector.broadcast %3 : vector<8x1xf32> to vector<8x128xf32>
    %15 = arith.mulf %14, %11 : vector<8x128xf32>
    %16 = arith.addf %13, %15 : vector<8x128xf32>
    %c0_10 = arith.constant 0 : index
    %c0_11 = arith.constant 0 : index
    %17 = vector.load %arg3[%c0_10, %c0_11] : memref<8x128xf32, #tpu.memory_space<vmem>>, vector<8x128xf32>
    tpu.vector_store %arg3[%c0_10, %c0_11], %16 {strides = array<i32>} : memref<8x128xf32, #tpu.memory_space<vmem>>, vector<8x128xf32>,
    %18 = vector.broadcast %4 : vector<8x1xf32> to vector<8x128xf32>
    %19 = arith.mulf %18, %9 : vector<8x128xf32>
    %20 = vector.broadcast %5 : vector<8x1xf32> to vector<8x128xf32>
    %21 = arith.mulf %20, %11 : vector<8x128xf32>
    %22 = arith.addf %19, %21 : vector<8x128xf32>
    %c0_12 = arith.constant 0 : index
    %c0_13 = arith.constant 0 : index
    %23 = vector.load %arg4[%c0_12, %c0_13] : memref<8x128xf32, #tpu.memory_space<vmem>>, vector<8x128xf32>
    tpu.vector_store %arg4[%c0_12, %c0_13], %22 {strides = array<i32>} : memref<8x128xf32, #tpu.memory_space<vmem>>, vector<8x128xf32>,
    return
  }
}

</mosaic_0001>

<llo_original>
// kernel: tpu_custom_call.1
$region0: #{tpu_custom_call.1}
  #allocation0 [shape = 'u32[]', space=smem, size = 0x4, offset = 0x4, fixed_abs, tag = 'smem constant byte address 0x4 - core index']
  #allocation1 [shape = 'u32[144,128]{1,0:T(1,128)}', space=vmem, size = 0x12000, scoped, tag = 'internal scratch']
  %s0 = inlined_call_operand.hbm [shape: f32[8,128], index: 0, kind: input, shape index: {}]
  %s1 = inlined_call_operand.hbm [shape: f32[8,128], index: 1, kind: input, shape index: {}]
  %s2 = inlined_call_operand.hbm [shape: f32[8,8], index: 2, kind: input, shape index: {}]
  %s3 = inlined_call_operand.hbm [shape: f32[8,128], index: 3, kind: output, shape index: {0}]
  %s4 = inlined_call_operand.hbm [shape: f32[8,128], index: 4, kind: output, shape index: {1}]
  %5 = xla_tuple %s3, %s4
  %s6 = sld [smem:[#allocation0]]
  $region42: #{tpu_custom_call.1} parent=0
    _
  %s8 = ssub.s32 1, %s6
  %s9 = scalar_select 0, %s8, %s6
  $region1: #{tpu_custom_call.1} parent=0
    #allocation2 [shape = 'u8[4096]{0}', space=vmem, size = 0x1000, scoped, tag = 'input window, operand 0, single buffered']
    #allocation3 [shape = 's32[1]{0}', space=sflag, size = 0x4, scoped, tag = 'scoped memory for tpu_custom_call.1']
    #allocation4 [shape = 's32[1]{0}', space=sflag, size = 0x4, scoped, tag = 'scoped memory for tpu_custom_call.1']
    #allocation5 [shape = 'u8[4096]{0}', space=vmem, size = 0x1000, scoped, tag = 'input window, operand 1, single buffered']
    #allocation6 [shape = 's32[1]{0}', space=sflag, size = 0x4, scoped, tag = 'scoped memory for tpu_custom_call.1']
    #allocation7 [shape = 'u8[4096]{0}', space=vmem, size = 0x1000, scoped, tag = 'input window, operand 2, single buffered']
    #allocation8 [shape = 'u8[4096]{0}', space=vmem, size = 0x1000, scoped, tag = 'output window, operand 0, single buffered']
    #allocation9 [shape = 'u8[4096]{0}', space=vmem, size = 0x1000, scoped, tag = 'output window, operand 1, single buffered']
    #allocation10 [shape = 's32[1]{0}', space=sflag, size = 0x4, scoped, tag = 'scoped memory for tpu_custom_call.1']
    %10 = vsyncpa [#allocation3], 0
    %11 = vsyncpa [#allocation6], 0
    %12 = vsyncpa [#allocation4], 0
    %13 = vsyncpa [#allocation10], 0
    // Predicated region
    $region2: #{tpu_custom_call.1} parent=1 // pred_check
      _
    $region3: #{tpu_custom_call.1} parent=1 // pred_check_branch
      %15 = sbr.rel (0) target = $region5
    $region4: #{tpu_custom_call.1} parent=1 // pred_region
      %s17 = ssub.s32 128, 128
      %18 = vsyncadd [#allocation3], %s17
      %s20 = sshll.u32 [#allocation2], 4
      %s21 = int_to_ptr.vmem [resolvable:$true] %s20
      %23 = dma.hbm_to_vmem [thread:$0]  %s0, 128, %s21, [#allocation3]
    $region5: #{tpu_custom_call.1} parent=1 // pred_fallthru
      _
    // Predicated region
    $region6: #{tpu_custom_call.1} parent=1 // pred_check
      _
    $region7: #{tpu_custom_call.1} parent=1 // pred_check_branch
      %25 = sbr.rel (0) target = $region9
    $region8: #{tpu_custom_call.1} parent=1 // pred_region
      %s27 = ssub.s32 128, 128
      %28 = vsyncadd [#allocation6], %s27
      %s30 = sshll.u32 [#allocation5], 4
      %s31 = int_to_ptr.vmem [resolvable:$true] %s30
      %33 = dma.hbm_to_vmem [thread:$0]  %s1, 128, %s31, [#allocation6]
    $region9: #{tpu_custom_call.1} parent=1 // pred_fallthru
      _
    // Predicated region
    $region10: #{tpu_custom_call.1} parent=1 // pred_check
      _
    $region11: #{tpu_custom_call.1} parent=1 // pred_check_branch
      %35 = sbr.rel (0) target = $region13
    $region12: #{tpu_custom_call.1} parent=1 // pred_region
      %s37 = ssub.s32 128, 128
      %38 = vsyncadd [#allocation6], %s37
      %s40 = sshll.u32 [#allocation7], 4
      %s41 = int_to_ptr.vmem [resolvable:$true] %s40
      %43 = dma.hbm_to_vmem [thread:$0]  %s2, 128, %s41, [#allocation6]
    $region13: #{tpu_custom_call.1} parent=1 // pred_fallthru
      _
    // Predicated region
    $region14: #{tpu_custom_call.1} parent=1 // pred_check
      _
    $region15: #{tpu_custom_call.1} parent=1 // pred_check_branch
      %45 = sbr.rel (0) target = $region17
    $region16: #{tpu_custom_call.1} parent=1 // pred_region
      %46 = dma.done [#allocation3], 128
    $region17: #{tpu_custom_call.1} parent=1 // pred_fallthru
      _
    // Predicated region
    $region18: #{tpu_custom_call.1} parent=1 // pred_check
      _
    $region19: #{tpu_custom_call.1} parent=1 // pred_check_branch
      %48 = sbr.rel (0) target = $region21
    $region20: #{tpu_custom_call.1} parent=1 // pred_region
      %49 = dma.done [#allocation6], 128
    $region21: #{tpu_custom_call.1} parent=1 // pred_fallthru
      _
    // Predicated region
    $region22: #{tpu_custom_call.1} parent=1 // pred_check
      _
    $region23: #{tpu_custom_call.1} parent=1 // pred_check_branch
      %51 = sbr.rel (0) target = $region25
    $region24: #{tpu_custom_call.1} parent=1 // pred_region
      %52 = dma.done [#allocation6], 128
    $region25: #{tpu_custom_call.1} parent=1 // pred_fallthru
      _
    %v53 = vld [vmem:[#allocation2] sm:$0xff]
    %v54 = vld [vmem:[#allocation5] sm:$0xff]
    %v55 = vld [vmem:[#allocation7] sm:$0xff]
    %57 = vset.pattern.permute.xlu0 4
    %58 = vperm.xlu0 %57, %v55
    %v59 = vpop.permute.xlu0 %58
    %v61 = vsub.f32 %v53, %v59
    %62 = vset.pattern.permute.xlu0 5
    %63 = vperm.xlu0 %62, %v55
    %v64 = vpop.permute.xlu0 %63
    %v66 = vsub.f32 %v54, %v64
    %67 = vset.pattern.permute.xlu0 0
    %68 = vperm.xlu0 %67, %v55
    %v69 = vpop.permute.xlu0 %68
    %v71 = vmul.f32 %v69, %v61
    %72 = vset.pattern.permute.xlu0 1
    %73 = vperm.xlu0 %72, %v55
    %v74 = vpop.permute.xlu0 %73
    %v76 = vmul.f32 %v74, %v66
    %v77 = vadd.f32 %v71, %v76
    %78 = vst [vmem:[#allocation8] sm:$0xff] %v77
    %79 = vset.pattern.permute.xlu0 2
    %80 = vperm.xlu0 %79, %v55
    %v81 = vpop.permute.xlu0 %80
    %v83 = vmul.f32 %v81, %v61
    %84 = vset.pattern.permute.xlu0 3
    %85 = vperm.xlu0 %84, %v55
    %v86 = vpop.permute.xlu0 %85
    %v88 = vmul.f32 %v86, %v66
    %v89 = vadd.f32 %v83, %v88
    %90 = vst [vmem:[#allocation9] sm:$0xff] %v89
    // Predicated region
    $region26: #{tpu_custom_call.1} parent=1 // pred_check
      _
    $region27: #{tpu_custom_call.1} parent=1 // pred_check_branch
      %92 = sbr.rel (0) target = $region29
    $region28: #{tpu_custom_call.1} parent=1 // pred_region
      %s94 = ssub.s32 128, 128
      %95 = vsyncadd [#allocation4], %s94
      %s97 = sshll.u32 [#allocation8], 4
      %s98 = int_to_ptr.vmem [resolvable:$true] %s97
      %100 = dma.vmem_to_hbm [thread:$0]  %s98, 128, %s3, [#allocation4]
    $region29: #{tpu_custom_call.1} parent=1 // pred_fallthru
      _
    // Predicated region
    $region30: #{tpu_custom_call.1} parent=1 // pred_check
      _
    $region31: #{tpu_custom_call.1} parent=1 // pred_check_branch
      %102 = sbr.rel (0) target = $region33
    $region32: #{tpu_custom_call.1} parent=1 // pred_region
      %s104 = ssub.s32 128, 128
      %105 = vsyncadd [#allocation10], %s104
      %s107 = sshll.u32 [#allocation9], 4
      %s108 = int_to_ptr.vmem [resolvable:$true] %s107
      %110 = dma.vmem_to_hbm [thread:$0]  %s108, 128, %s4, [#allocation10]
    $region33: #{tpu_custom_call.1} parent=1 // pred_fallthru
      _
    // Predicated region
    $region34: #{tpu_custom_call.1} parent=1 // pred_check
      _
    $region35: #{tpu_custom_call.1} parent=1 // pred_check_branch
      %112 = sbr.rel (0) target = $region37
    $region36: #{tpu_custom_call.1} parent=1 // pred_region
      %113 = dma.done [#allocation4], 128
    $region37: #{tpu_custom_call.1} parent=1 // pred_fallthru
      _
    // Predicated region
    $region38: #{tpu_custom_call.1} parent=1 // pred_check
      _
    $region39: #{tpu_custom_call.1} parent=1 // pred_check_branch
      %115 = sbr.rel (0) target = $region41
    $region40: #{tpu_custom_call.1} parent=1 // pred_region
      %116 = dma.done [#allocation10], 128
    $region41: #{tpu_custom_call.1} parent=1 // pred_fallthru
      _
    %117 = vsyncpa [#allocation3], 1
    %118 = vsyncpa [#allocation6], 1
    %119 = vsyncpa [#allocation4], 1
    %120 = vsyncpa [#allocation10], 1

</llo_original>
